<compile_context>
chip_gen: v7x
topology: tpu7x:2x2x1
jax: 0.10.0
libtpu: 0.0.40
codegen_flags: <defaults>
</compile_context>

<pallas_src>
import numpy as np
import jax
import jax.numpy as jnp
from jax.experimental import pallas as pl
from jax.experimental.pallas import tpu as pltpu


# ----------------------------------------------------------------------------
# Deterministic parameter setup (Gram-Schmidt orthogonal filters), plain numpy.
# ----------------------------------------------------------------------------
def _gram_schmidt_np(vs):
    # vs: (n, 1, h, w) - mirrors the torch reference exactly (global dot / norm)
    out = []
    for x in vs:
        x = x.astype(np.float64)
        for y in out:
            x = x - (y * x).sum() / (y * y).sum() * y
        x = x / np.sqrt((x * x).sum())
        out.append(x)
    return np.stack(out)


def initialize_orthogonal_filters(c, h, w, key):
    if h * w < c:
        n = c // (h * w)
        keys = jax.random.split(key, n)
        grams = []
        for i in range(n):
            rnd = np.asarray(jax.random.uniform(keys[i], (h * w, 1, h, w)))
            grams.append(_gram_schmidt_np(rnd))
        return np.concatenate(grams, axis=0).astype(np.float32)
    else:
        rnd = np.asarray(jax.random.uniform(key, (c, 1, h, w)))
        return _gram_schmidt_np(rnd).astype(np.float32)


def build_gram_schmidt_transform(c, h, key):
    filt = initialize_orthogonal_filters(c, h, h, key).reshape(c, h, h)
    return jnp.asarray(filt, dtype=jnp.float32)  # constant_filter buffer (c, h, h)


# ----------------------------------------------------------------------------
# adaptive_avg_pool2d folded into the (constant) filter.
# ----------------------------------------------------------------------------
def _adaptive_pool_matrix(in_size, out_size):
    """P[o, i] with adaptive_avg_pool2d bins: pool(x)[o] = sum_i P[o, i] x[i]."""
    P = np.zeros((out_size, in_size), dtype=np.float64)
    for o in range(out_size):
        start = (o * in_size) // out_size
        end = -(-((o + 1) * in_size) // out_size)  # ceil
        P[o, start:end] = 1.0 / (end - start)
    return P.astype(np.float32)


def prepare_filter(constant_filter, h, w):
    """Fold adaptive_avg_pool2d into the filter; call ONCE per (filter, h, w).

    Returns the effective filter as a (C, h*w) float32 array so the kernel can
    read x at full resolution exactly once.
    """
    C, H, W = constant_filter.shape
    f32 = constant_filter.astype(jnp.float32)
    if (h, w) != (H, W):
        Ph = jnp.asarray(_adaptive_pool_matrix(h, H))  # (H, h)
        Pw = jnp.asarray(_adaptive_pool_matrix(w, W))  # (W, w)
        f32 = jnp.einsum("cHW,Hh,Ww->chw", f32, Ph, Pw)
    return f32.reshape(C, h * w)


# ----------------------------------------------------------------------------
# Batch-tile sizing: ~8 MiB per x buffer; output block (TB, C) needs TB to be a
# multiple of 8 (sublanes) or equal to the full batch B.
# ----------------------------------------------------------------------------
def _choose_batch_tile(B, C, HW, itemsize, target_bytes=8 * 1024 * 1024):
    row_bytes = max(1, C * HW * itemsize)
    rows = max(1, target_bytes // row_bytes)
    if B <= 8 or rows >= B:
        # Whole batch fits in one tile; split into >=2 tiles for v7x megacore
        # sharding when B is large enough for two well-formed tiles.
        if B >= 16 and rows >= B:
            return ((B + 1) // 2 + 7) // 8 * 8
        return B
    # TODO(synk): if a single 8-row tile already exceeds VMEM (huge C*HW), a
    # second (reduction) grid axis over HW with an accumulator would be needed.
    return max(8, (rows // 8) * 8)


# ----------------------------------------------------------------------------
# Pallas kernel: out[b, c] = sum_k x[b, c, k] * f[c, k]
# ----------------------------------------------------------------------------
def _attention_kernel(x_ref, f_ref, o_ref):
    tb, c, hw = x_ref.shape

    def chunk(lo, width):
        xv = x_ref[:, :, lo:lo + width].astype(jnp.float32)
        fv = f_ref[:, lo:lo + width]
        return xv * fv[None, :, :]

    if hw % 128 == 0 and hw > 128:
        n_chunks = hw // 128
        max_unroll = 32
        if n_chunks <= max_unroll:
            # VPU pre-adds of 128-lane chunks; one cross-lane (XLU) reduce left.
            acc = chunk(0, 128)
            for j in range(1, n_chunks):
                acc = acc + chunk(j * 128, 128)
        else:
            # Large HW: rolled loop over 1024-lane super-chunks (mem-bound
            # kernel, VPU has slack; avoids straight-line code bloat).
            sc_lanes = 1024
            n_super = hw // sc_lanes

            def body(j, acc):
                base = pl.multiple_of(j * sc_lanes, sc_lanes)
                xv = x_ref[:, :, pl.ds(base, sc_lanes)].astype(jnp.float32)
                fv = f_ref[:, pl.ds(base, sc_lanes)]
                part = xv * fv[None, :, :]
                s = part[:, :, 0:128]
                for t in range(1, sc_lanes // 128):
                    s = s + part[:, :, t * 128:(t + 1) * 128]
                return acc + s

            acc = jax.lax.fori_loop(0, n_super, body,
                                    jnp.zeros((tb, c, 128), jnp.float32))
            for j in range(n_super * (sc_lanes // 128), n_chunks):
                acc = acc + chunk(j * 128, 128)
        o_ref[...] = jnp.sum(acc, axis=-1).astype(o_ref.dtype)
    else:
        acc = x_ref[...].astype(jnp.float32) * f_ref[...][None, :, :]
        o_ref[...] = jnp.sum(acc, axis=-1).astype(o_ref.dtype)


def attention_forward(constant_filter, x, *, f_rows=None):
    """Equivalent of Attention().forward(FWT, x).

    x: (B, C, h, w)  NCHW, any float dtype (kept native over HBM)
    constant_filter: (C, H, W) float32
    f_rows: optional precomputed prepare_filter(constant_filter, h, w)
    returns: (B, C) in x.dtype
    """
    B, C, h, w = x.shape
    Cf, H, W = constant_filter.shape
    assert C == Cf

    if w <= 1:
        # torch `while input[0].size(-1) > 1` never executes.
        return x.reshape(B, -1)

    if f_rows is None:
        f_rows = prepare_filter(constant_filter, h, w)   # (C, HW) f32

    HW = h * w
    x3 = x.reshape(B, C, HW)          # contiguous reshape, native dtype over HBM
    itemsize = x3.dtype.itemsize

    TB = _choose_batch_tile(B, C, HW, itemsize)

    # Keep the (double-buffered) working set inside the most constrained
    # generation (v7x: 64 MiB physical VMEM).
    f_bytes = C * HW * 4

    def working_set(tb):
        return 2 * tb * C * HW * itemsize + 2 * f_bytes + 2 * tb * C * itemsize

    budget = 48 * 1024 * 1024
    while TB > 8 and working_set(TB) > budget:
        new_tb = max(8, ((TB // 2) // 8) * 8)
        if new_tb == TB:
            break
        TB = new_tb

    num_tiles = pl.cdiv(B, TB)

    # Raise above v5e's 16 MiB scoped default; leave headroom below v7x's
    # 64 MiB physical VMEM.
    vmem_limit = int(min(max(32 * 1024 * 1024, working_set(TB) + (4 << 20)),
                         56 * 1024 * 1024))

    cost = pl.CostEstimate(
        flops=2 * B * C * HW,
        transcendentals=0,
        bytes_accessed=int(B * C * HW * itemsize + f_bytes + B * C * itemsize),
    )

    def run(single_buffer_filter):
        if single_buffer_filter:
            # Constant index_map => the second pipeline buffer is pure waste.
            f_spec = pl.BlockSpec((C, HW), lambda i: (0, 0),
                                  pipeline_mode=pl.Buffered(1))
        else:
            f_spec = pl.BlockSpec((C, HW), lambda i: (0, 0))
        return pl.pallas_call(
            _attention_kernel,
            out_shape=jax.ShapeDtypeStruct((B, C), x.dtype),
            grid=(num_tiles,),
            in_specs=[
                pl.BlockSpec((TB, C, HW), lambda i: (i, 0, 0)),  # streamed x tiles
                f_spec,                                          # resident filter
            ],
            out_specs=pl.BlockSpec((TB, C), lambda i: (i, 0)),
            compiler_params=pltpu.CompilerParams(
                dimension_semantics=("parallel",),   # shard grid over 2 TCs on v7x
                vmem_limit_bytes=vmem_limit,
            ),
            cost_estimate=cost,
        )(x3, f_rows)

    try:
        out = run(True)
    except Exception:
        # Fallback if single-buffering the resident filter is not supported.
        out = run(False)

    return out.reshape(B, -1)


if __name__ == "__main__":
    key = jax.random.PRNGKey(0)
    k_filter, k_input = jax.random.split(key)

    B, C, Hsp = 2, 4, 16
    constant_filter = build_gram_schmidt_transform(C, Hsp, k_filter)      # (4, 16, 16)
    x = jax.random.normal(k_input, (B, C, Hsp, Hsp), dtype=jnp.float32)   # (2, 4, 16, 16)

    # Hoisted filter preprocessing (done once per (filter, h, w)).
    f_rows = prepare_filter(constant_filter, Hsp, Hsp)

    out = attention_forward(constant_filter, x, f_rows=f_rows)
    out = jax.block_until_ready(out)

    # Reference check in plain JAX (same math as the torch module).
    ref = jnp.sum(constant_filter[None] * x, axis=(-1, -2)).reshape(B, -1)
    np.testing.assert_allclose(np.asarray(out), np.asarray(ref), rtol=1e-5, atol=1e-5)

    print("KERNEL_OK")
</pallas_src>

<mosaic_0001>
module attributes {stable_mosaic.version = 11 : i64} {
  func.func @_attention_kernel(%arg0: i32, %arg1: memref<2x4x256xf32, #tpu.memory_space<vmem>>, %arg2: memref<4x256xf32, #tpu.memory_space<vmem>>, %arg3: memref<2x4xf32, #tpu.memory_space<vmem>>) attributes {dimension_semantics = [#tpu.dimension_semantics<parallel>], iteration_bounds = array<i64: 1>, scalar_prefetch = 0 : i64, scratch_operands = 0 : i64, tpu.core_type = #tpu.core_type<tc>, window_params = [{transform_indices = @transform_0, window_bounds = array<i64: 2, 4, 256>}, {pipeline_mode = #tpu.pipeline_mode<synchronous>, transform_indices = @transform_1, window_bounds = array<i64: 4, 256>}, {transform_indices = @transform_2, window_bounds = array<i64: 2, 4>}]} {
    %c0 = arith.constant 0 : index
    %c0_0 = arith.constant 0 : index
    %c0_1 = arith.constant 0 : index
    %0 = vector.load %arg1[%c0, %c0_0, %c0_1] : memref<2x4x256xf32, #tpu.memory_space<vmem>>, vector<2x4x128xf32>
    %c0_2 = arith.constant 0 : index
    %c0_3 = arith.constant 0 : index
    %1 = vector.load %arg2[%c0_2, %c0_3] : memref<4x256xf32, #tpu.memory_space<vmem>>, vector<4x128xf32>
    %2 = vector.shape_cast %1 : vector<4x128xf32> to vector<1x4x128xf32>
    %3 = vector.broadcast %2 : vector<1x4x128xf32> to vector<2x4x128xf32>
    %4 = arith.mulf %0, %3 : vector<2x4x128xf32>
    %c0_4 = arith.constant 0 : index
    %c0_5 = arith.constant 0 : index
    %c128 = arith.constant 128 : index
    %5 = vector.load %arg1[%c0_4, %c0_5, %c128] : memref<2x4x256xf32, #tpu.memory_space<vmem>>, vector<2x4x128xf32>
    %c0_6 = arith.constant 0 : index
    %c128_7 = arith.constant 128 : index
    %6 = vector.load %arg2[%c0_6, %c128_7] : memref<4x256xf32, #tpu.memory_space<vmem>>, vector<4x128xf32>
    %7 = vector.shape_cast %6 : vector<4x128xf32> to vector<1x4x128xf32>
    %8 = vector.broadcast %7 : vector<1x4x128xf32> to vector<2x4x128xf32>
    %9 = arith.mulf %5, %8 : vector<2x4x128xf32>
    %10 = arith.addf %4, %9 : vector<2x4x128xf32>
    %cst = arith.constant dense<0.000000e+00> : vector<2x4xf32>
    %11 = vector.multi_reduction <add>, %10, %cst [2] : vector<2x4x128xf32> to vector<2x4xf32>
    %c0_8 = arith.constant 0 : index
    %c0_9 = arith.constant 0 : index
    %12 = vector.load %arg3[%c0_8, %c0_9] : memref<2x4xf32, #tpu.memory_space<vmem>>, vector<2x4xf32>
    tpu.vector_store %arg3[%c0_8, %c0_9], %11 {strides = array<i32>} : memref<2x4xf32, #tpu.memory_space<vmem>>, vector<2x4xf32>,
    return
  }
  func.func @transform_0(%arg0: i32) -> (i32, i32, i32) {
    %c0_i32 = arith.constant 0 : i32
    %c0_i32_0 = arith.constant 0 : i32
    %c0_i32_1 = arith.constant 0 : i32
    return %arg0, %c0_i32, %c0_i32_0 : i32, i32, i32
  }
  func.func @transform_1(%arg0: i32) -> (i32, i32) {
    %c0_i32 = arith.constant 0 : i32
    %c0_i32_0 = arith.constant 0 : i32
    %c0_i32_1 = arith.constant 0 : i32
    return %c0_i32, %c0_i32_0 : i32, i32
  }
  func.func @transform_2(%arg0: i32) -> (i32, i32) {
    %c0_i32 = arith.constant 0 : i32
    %c0_i32_0 = arith.constant 0 : i32
    return %arg0, %c0_i32 : i32, i32
  }
}

module attributes {stable_mosaic.version = 11 : i64} {
  func.func @_attention_kernel(%arg0: i32, %arg1: memref<2x4x256xf32, #tpu.memory_space<vmem>>, %arg2: memref<4x256xf32, #tpu.memory_space<vmem>>, %arg3: memref<2x4xf32, #tpu.memory_space<vmem>>) attributes {dimension_semantics = [#tpu.dimension_semantics<parallel>], iteration_bounds = array<i64: 1>, scalar_prefetch = 0 : i64, scratch_operands = 0 : i64, tpu.core_type = #tpu.core_type<tc>, window_params = [{transform_indices = @transform_0, window_bounds = array<i64: 2, 4, 256>}, {pipeline_mode = #tpu.pipeline_mode<synchronous>, transform_indices = @transform_1, window_bounds = array<i64: 4, 256>}, {transform_indices = @transform_2, window_bounds = array<i64: 2, 4>}]} {
    %c0 = arith.constant 0 : index
    %c0_0 = arith.constant 0 : index
    %c0_1 = arith.constant 0 : index
    %0 = vector.load %arg1[%c0, %c0_0, %c0_1] : memref<2x4x256xf32, #tpu.memory_space<vmem>>, vector<2x4x128xf32>
    %c0_2 = arith.constant 0 : index
    %c0_3 = arith.constant 0 : index
    %1 = vector.load %arg2[%c0_2, %c0_3] : memref<4x256xf32, #tpu.memory_space<vmem>>, vector<4x128xf32>
    %2 = vector.shape_cast %1 : vector<4x128xf32> to vector<1x4x128xf32>
    %3 = vector.broadcast %2 : vector<1x4x128xf32> to vector<2x4x128xf32>
    %4 = arith.mulf %0, %3 : vector<2x4x128xf32>
    %c0_4 = arith.constant 0 : index
    %c0_5 = arith.constant 0 : index
    %c128 = arith.constant 128 : index
    %5 = vector.load %arg1[%c0_4, %c0_5, %c128] : memref<2x4x256xf32, #tpu.memory_space<vmem>>, vector<2x4x128xf32>
    %c0_6 = arith.constant 0 : index
    %c128_7 = arith.constant 128 : index
    %6 = vector.load %arg2[%c0_6, %c128_7] : memref<4x256xf32, #tpu.memory_space<vmem>>, vector<4x128xf32>
    %7 = vector.shape_cast %6 : vector<4x128xf32> to vector<1x4x128xf32>
    %8 = vector.broadcast %7 : vector<1x4x128xf32> to vector<2x4x128xf32>
    %9 = arith.mulf %5, %8 : vector<2x4x128xf32>
    %10 = arith.addf %4, %9 : vector<2x4x128xf32>
    %cst = arith.constant dense<0.000000e+00> : vector<2x4xf32>
    %11 = vector.multi_reduction <add>, %10, %cst [2] : vector<2x4x128xf32> to vector<2x4xf32>
    %c0_8 = arith.constant 0 : index
    %c0_9 = arith.constant 0 : index
    %12 = vector.load %arg3[%c0_8, %c0_9] : memref<2x4xf32, #tpu.memory_space<vmem>>, vector<2x4xf32>
    tpu.vector_store %arg3[%c0_8, %c0_9], %11 {strides = array<i32>} : memref<2x4xf32, #tpu.memory_space<vmem>>, vector<2x4xf32>,
    return
  }
  func.func @transform_0(%arg0: i32) -> (i32, i32, i32) {
    %c0_i32 = arith.constant 0 : i32
    %c0_i32_0 = arith.constant 0 : i32
    %c0_i32_1 = arith.constant 0 : i32
    return %arg0, %c0_i32, %c0_i32_0 : i32, i32, i32
  }
  func.func @transform_1(%arg0: i32) -> (i32, i32) {
    %c0_i32 = arith.constant 0 : i32
    %c0_i32_0 = arith.constant 0 : i32
    %c0_i32_1 = arith.constant 0 : i32
    return %c0_i32, %c0_i32_0 : i32, i32
  }
  func.func @transform_2(%arg0: i32) -> (i32, i32) {
    %c0_i32 = arith.constant 0 : i32
    %c0_i32_0 = arith.constant 0 : i32
    return %arg0, %c0_i32 : i32, i32
  }
}

</mosaic_0001>

<llo_original>
// kernel: tpu_custom_call.1
$region0: #{tpu_custom_call.1}
  #allocation0 [shape = 'u32[]', space=smem, size = 0x4, offset = 0x4, fixed_abs, tag = 'smem constant byte address 0x4 - core index']
  #allocation1 [shape = 'u32[144,128]{1,0:T(1,128)}', space=vmem, size = 0x12000, scoped, tag = 'internal scratch']
  %s0 = inlined_call_operand.hbm [shape: f32[2,4,256], index: 0, kind: input, shape index: {}]
  %s1 = inlined_call_operand.hbm [shape: f32[4,256], index: 1, kind: input, shape index: {}]
  %s2 = inlined_call_operand.hbm [shape: f32[2,4], index: 2, kind: output, shape index: {}]
  %s3 = sld [smem:[#allocation0]]
  $region26: #{tpu_custom_call.1} parent=0
    _
  %s5 = ssub.s32 1, %s3
  %s6 = scalar_select 0, %s5, %s3
  $region1: #{tpu_custom_call.1} parent=0
    #allocation2 [shape = 'u8[8192]{0}', space=vmem, size = 0x2000, scoped, tag = 'input window, operand 0, single buffered']
    #allocation3 [shape = 's32[1]{0}', space=sflag, size = 0x4, scoped, tag = 'scoped memory for tpu_custom_call.1']
    #allocation4 [shape = 's32[1]{0}', space=sflag, size = 0x4, scoped, tag = 'scoped memory for tpu_custom_call.1']
    #allocation5 [shape = 'u8[4096]{0}', space=vmem, size = 0x1000, scoped, tag = 'input window, operand 1, single buffered']
    #allocation6 [shape = 's32[1]{0}', space=sflag, size = 0x4, scoped, tag = 'scoped memory for tpu_custom_call.1']
    #allocation7 [shape = 'u8[1024]{0}', space=vmem, size = 0x400, scoped, tag = 'output window, operand 0, single buffered']
    %7 = vsyncpa [#allocation3], 0
    %8 = vsyncpa [#allocation6], 0
    %9 = vsyncpa [#allocation4], 0
    // Predicated region
    $region2: #{tpu_custom_call.1} parent=1 // pred_check
      _
    $region3: #{tpu_custom_call.1} parent=1 // pred_check_branch
      %11 = sbr.rel (0) target = $region5
    $region4: #{tpu_custom_call.1} parent=1 // pred_region
      %s13 = ssub.s32 256, 256
      %14 = vsyncadd [#allocation3], %s13
      %s15 = sshll.u32 [#allocation2], 4
      %s16 = int_to_ptr.vmem [resolvable:$true] %s15
      %21 = dma.hbm_to_vmem [thread:$0]  %s0, 256, %s16, [#allocation3], 128, 128, 8
    $region5: #{tpu_custom_call.1} parent=1 // pred_fallthru
      _
    // Predicated region
    $region6: #{tpu_custom_call.1} parent=1 // pred_check
      _
    $region7: #{tpu_custom_call.1} parent=1 // pred_check_branch
      %23 = sbr.rel (0) target = $region9
    $region8: #{tpu_custom_call.1} parent=1 // pred_region
      %s25 = ssub.s32 128, 128
      %26 = vsyncadd [#allocation6], %s25
      %s28 = sshll.u32 [#allocation5], 4
      %s29 = int_to_ptr.vmem [resolvable:$true] %s28
      %31 = dma.hbm_to_vmem [thread:$0]  %s1, 128, %s29, [#allocation6]
    $region9: #{tpu_custom_call.1} parent=1 // pred_fallthru
      _
    // Predicated region
    $region10: #{tpu_custom_call.1} parent=1 // pred_check
      _
    $region11: #{tpu_custom_call.1} parent=1 // pred_check_branch
      %33 = sbr.rel (0) target = $region13
    $region12: #{tpu_custom_call.1} parent=1 // pred_region
      %34 = dma.done [#allocation3], 256
    $region13: #{tpu_custom_call.1} parent=1 // pred_fallthru
      _
    // Predicated region
    $region14: #{tpu_custom_call.1} parent=1 // pred_check
      _
    $region15: #{tpu_custom_call.1} parent=1 // pred_check_branch
      %36 = sbr.rel (0) target = $region17
    $region16: #{tpu_custom_call.1} parent=1 // pred_region
      %37 = dma.done [#allocation6], 128
    $region17: #{tpu_custom_call.1} parent=1 // pred_fallthru
      _
    %v38 = vld [vmem:[#allocation2] sm:$0xf]
    %v39 = vld [vmem:[#allocation2 + $0x8] sm:$0xf]
    %v40 = vld [vmem:[#allocation5] sm:$0xf]
    %v41 = vmul.f32 %v38, %v40
    %v42 = vmul.f32 %v39, %v40
    %v43 = vld [vmem:[#allocation2 + $0x4] sm:$0xf]
    %v44 = vld [vmem:[#allocation2 + $0xc] sm:$0xf]
    %v45 = vld [vmem:[#allocation5 + $0x4] sm:$0xf]
    %v46 = vmul.f32 %v43, %v45
    %v47 = vmul.f32 %v44, %v45
    %v48 = vadd.f32 %v41, %v46
    %v49 = vadd.f32 %v42, %v47
    %vm50 = vcmask 1043456
    %v51 = vsel %vm50, %v48, 0.0
    %52 = vadd.xlane.f32.xlu0 %v51
    %v53 = vpop.xlane.xlu0 %52
    %v54 = vsel %vm50, %v49, 0.0
    %55 = vadd.xlane.f32.xlu0 %v54
    %v56 = vpop.xlane.xlu0 %55
    %v59 = vlaneseq
    %v60 = vand.u32 %v59, 127
    %v61 = vlaneseq
    %v62 = vshrl.u32 %v61, 7
    %v63 = vsub.s32 %v60, %v62
    %v64 = vrot.slane %v53, %v63
    %v65 = vlaneseq
    %v66 = vshrl.u32 %v65, 7
    %v67 = vsub.s32 %v60, %v66
    %v68 = vrot.slane %v56, %v67
    %vm69 = vcmask 1041409
    %v70 = vsel %vm69, %v68, %v64
    %vm72 = vcmask 25600
    %73 = vst.msk [vmem:[#allocation7] sm:$0x3] %vm72, %v70
    // Predicated region
    $region18: #{tpu_custom_call.1} parent=1 // pred_check
      _
    $region19: #{tpu_custom_call.1} parent=1 // pred_check_branch
      %75 = sbr.rel (0) target = $region21
    $region20: #{tpu_custom_call.1} parent=1 // pred_region
      %s77 = ssub.s32 32, 32
      %78 = vsyncadd [#allocation4], %s77
      %s80 = sshll.u32 [#allocation7], 4
      %s81 = int_to_ptr.vmem [resolvable:$true] %s80
      %83 = dma.vmem_to_hbm [thread:$0]  %s81, 32, %s2, [#allocation4]
    $region21: #{tpu_custom_call.1} parent=1 // pred_fallthru
      _
    // Predicated region
    $region22: #{tpu_custom_call.1} parent=1 // pred_check
      _
    $region23: #{tpu_custom_call.1} parent=1 // pred_check_branch
      %85 = sbr.rel (0) target = $region25
    $region24: #{tpu_custom_call.1} parent=1 // pred_region
      %86 = dma.done [#allocation4], 32
    $region25: #{tpu_custom_call.1} parent=1 // pred_fallthru
      _
    %87 = vsyncpa [#allocation3], 1
    %88 = vsyncpa [#allocation6], 1
    %89 = vsyncpa [#allocation4], 1

// kernel: tpu_custom_call.1
$region0: #{tpu_custom_call.1}
  #allocation0 [shape = 'u32[]', space=smem, size = 0x4, offset = 0x4, fixed_abs, tag = 'smem constant byte address 0x4 - core index']
  #allocation1 [shape = 'u32[144,128]{1,0:T(1,128)}', space=vmem, size = 0x12000, scoped, tag = 'internal scratch']
  %s0 = inlined_call_operand.hbm [shape: f32[2,4,256], index: 0, kind: input, shape index: {}]
  %s1 = inlined_call_operand.hbm [shape: f32[4,256], index: 1, kind: input, shape index: {}]
  %s2 = inlined_call_operand.hbm [shape: f32[2,4], index: 2, kind: output, shape index: {}]
  %s3 = sld [smem:[#allocation0]]
  $region26: #{tpu_custom_call.1} parent=0
    _
  %s5 = ssub.s32 1, %s3
  %s6 = scalar_select 0, %s5, %s3
  $region1: #{tpu_custom_call.1} parent=0
    #allocation2 [shape = 'u8[8192]{0}', space=vmem, size = 0x2000, scoped, tag = 'input window, operand 0, single buffered']
    #allocation3 [shape = 's32[1]{0}', space=sflag, size = 0x4, scoped, tag = 'scoped memory for tpu_custom_call.1']
    #allocation4 [shape = 's32[1]{0}', space=sflag, size = 0x4, scoped, tag = 'scoped memory for tpu_custom_call.1']
    #allocation5 [shape = 'u8[4096]{0}', space=vmem, size = 0x1000, scoped, tag = 'input window, operand 1, single buffered']
    #allocation6 [shape = 's32[1]{0}', space=sflag, size = 0x4, scoped, tag = 'scoped memory for tpu_custom_call.1']
    #allocation7 [shape = 'u8[1024]{0}', space=vmem, size = 0x400, scoped, tag = 'output window, operand 0, single buffered']
    %7 = vsyncpa [#allocation3], 0
    %8 = vsyncpa [#allocation6], 0
    %9 = vsyncpa [#allocation4], 0
    // Predicated region
    $region2: #{tpu_custom_call.1} parent=1 // pred_check
      _
    $region3: #{tpu_custom_call.1} parent=1 // pred_check_branch
      %11 = sbr.rel (0) target = $region5
    $region4: #{tpu_custom_call.1} parent=1 // pred_region
      %s13 = ssub.s32 256, 256
      %14 = vsyncadd [#allocation3], %s13
      %s15 = sshll.u32 [#allocation2], 4
      %s16 = int_to_ptr.vmem [resolvable:$true] %s15
      %21 = dma.hbm_to_vmem [thread:$0]  %s0, 256, %s16, [#allocation3], 128, 128, 8
    $region5: #{tpu_custom_call.1} parent=1 // pred_fallthru
      _
    // Predicated region
    $region6: #{tpu_custom_call.1} parent=1 // pred_check
      _
    $region7: #{tpu_custom_call.1} parent=1 // pred_check_branch
      %23 = sbr.rel (0) target = $region9
    $region8: #{tpu_custom_call.1} parent=1 // pred_region
      %s25 = ssub.s32 128, 128
      %26 = vsyncadd [#allocation6], %s25
      %s28 = sshll.u32 [#allocation5], 4
      %s29 = int_to_ptr.vmem [resolvable:$true] %s28
      %31 = dma.hbm_to_vmem [thread:$0]  %s1, 128, %s29, [#allocation6]
    $region9: #{tpu_custom_call.1} parent=1 // pred_fallthru
      _
    // Predicated region
    $region10: #{tpu_custom_call.1} parent=1 // pred_check
      _
    $region11: #{tpu_custom_call.1} parent=1 // pred_check_branch
      %33 = sbr.rel (0) target = $region13
    $region12: #{tpu_custom_call.1} parent=1 // pred_region
      %34 = dma.done [#allocation3], 256
    $region13: #{tpu_custom_call.1} parent=1 // pred_fallthru
      _
    // Predicated region
    $region14: #{tpu_custom_call.1} parent=1 // pred_check
      _
    $region15: #{tpu_custom_call.1} parent=1 // pred_check_branch
      %36 = sbr.rel (0) target = $region17
    $region16: #{tpu_custom_call.1} parent=1 // pred_region
      %37 = dma.done [#allocation6], 128
    $region17: #{tpu_custom_call.1} parent=1 // pred_fallthru
      _
    %v38 = vld [vmem:[#allocation2] sm:$0xf]
    %v39 = vld [vmem:[#allocation2 + $0x8] sm:$0xf]
    %v40 = vld [vmem:[#allocation5] sm:$0xf]
    %v41 = vmul.f32 %v38, %v40
    %v42 = vmul.f32 %v39, %v40
    %v43 = vld [vmem:[#allocation2 + $0x4] sm:$0xf]
    %v44 = vld [vmem:[#allocation2 + $0xc] sm:$0xf]
    %v45 = vld [vmem:[#allocation5 + $0x4] sm:$0xf]
    %v46 = vmul.f32 %v43, %v45
    %v47 = vmul.f32 %v44, %v45
    %v48 = vadd.f32 %v41, %v46
    %v49 = vadd.f32 %v42, %v47
    %vm50 = vcmask 1043456
    %v51 = vsel %vm50, %v48, 0.0
    %52 = vadd.xlane.f32.xlu0 %v51
    %v53 = vpop.xlane.xlu0 %52
    %v54 = vsel %vm50, %v49, 0.0
    %55 = vadd.xlane.f32.xlu0 %v54
    %v56 = vpop.xlane.xlu0 %55
    %v59 = vlaneseq
    %v60 = vand.u32 %v59, 127
    %v61 = vlaneseq
    %v62 = vshrl.u32 %v61, 7
    %v63 = vsub.s32 %v60, %v62
    %v64 = vrot.slane %v53, %v63
    %v65 = vlaneseq
    %v66 = vshrl.u32 %v65, 7
    %v67 = vsub.s32 %v60, %v66
    %v68 = vrot.slane %v56, %v67
    %vm69 = vcmask 1041409
    %v70 = vsel %vm69, %v68, %v64
    %vm72 = vcmask 25600
    %73 = vst.msk [vmem:[#allocation7] sm:$0x3] %vm72, %v70
    // Predicated region
    $region18: #{tpu_custom_call.1} parent=1 // pred_check
      _
    $region19: #{tpu_custom_call.1} parent=1 // pred_check_branch
      %75 = sbr.rel (0) target = $region21
    $region20: #{tpu_custom_call.1} parent=1 // pred_region
      %s77 = ssub.s32 32, 32
      %78 = vsyncadd [#allocation4], %s77
      %s80 = sshll.u32 [#allocation7], 4
      %s81 = int_to_ptr.vmem [resolvable:$true] %s80
      %83 = dma.vmem_to_hbm [thread:$0]  %s81, 32, %s2, [#allocation4]
    $region21: #{tpu_custom_call.1} parent=1 // pred_fallthru
      _
    // Predicated region
    $region22: #{tpu_custom_call.1} parent=1 // pred_check
      _
    $region23: #{tpu_custom_call.1} parent=1 // pred_check_branch
      %85 = sbr.rel (0) target = $region25
    $region24: #{tpu_custom_call.1} parent=1 // pred_region
      %86 = dma.done [#allocation4], 32
    $region25: #{tpu_custom_call.1} parent=1 // pred_fallthru
      _
    %87 = vsyncpa [#allocation3], 1
    %88 = vsyncpa [#allocation6], 1
    %89 = vsyncpa [#allocation4], 1

</llo_original>
